<compile_context>
chip_gen: v5e
topology: v5e:2x2
jax: 0.10.0
libtpu: 0.0.40
codegen_flags: <defaults>
</compile_context>

<pallas_src>
import functools

import jax
import jax.numpy as jnp
from jax.experimental import pallas as pl
from jax.experimental.pallas import tpu as pltpu


# ----------------------------------------------------------------------------
# Pallas kernel (one grid step == one group of per-sample frames)
# ----------------------------------------------------------------------------
def _temporal_block_kernel(x_ref, mask_ref, w1_ref, b1_ref, w2_ref, b2_ref,
                           wd_ref, bd_ref, out_ref, *, K, dilation):
    """TemporalBlock forward on a lane-dense, per-sample-framed slab tile.

    x_ref:    (C_in_p, TWx)        bf16; frames [R zeros|L data|R zeros] + zero tail
    mask_ref: (1, TWx)             f32 {0,1}; zero outside each frame's valid band
    w1_ref:   (C_out_p, K*C_in_p)  bf16, per-tap weights on the contraction dim
    b1_ref:   (C_out_p, 1)         f32
    w2_ref:   (C_out_p, K*C_out_p) bf16
    b2_ref:   (C_out_p, 1)         f32
    wd_ref:   (C_out_p, C_in_p)    bf16 (1x1 downsample / identity)
    bd_ref:   (C_out_p, 1)         f32
    out_ref:  (C_out_p, TW)        bf16, TW multiple of 128 (unmasked stores)
    """
    R = (K - 1) * dilation                      # conv reach (== 2*P)
    TW = out_ref.shape[1]                       # output tile width
    W1 = TW + R                                 # conv1 evaluation width

    x_b = x_ref[...]                            # (C_in_p, TWx) bf16 -- no f32 copy

    # ---- conv1 + bias + ReLU (dropout1 -> identity) --------------------------
    # Rows k*C + c, column j  ->  x[c, j + k*dilation]; static lane-offset
    # slices of the in-register bf16 slab, concatenated along the 16-aligned
    # sublane/contraction axis: ONE MXU matmul for the whole conv layer.
    taps1 = jnp.concatenate(
        [x_b[:, k * dilation:k * dilation + W1] for k in range(K)], axis=0)
    h1 = jnp.dot(w1_ref[...], taps1, preferred_element_type=jnp.float32)
    h1 = jnp.maximum(h1 + b1_ref[...], 0.0)                    # (C_out_p, W1) f32

    # Zero the per-frame halo columns (emulates conv2's zero padding) with one
    # broadcast multiply against the precomputed mask, then downcast ONCE.
    h1 = (h1 * mask_ref[:, :W1]).astype(jnp.bfloat16)

    # ---- conv2 + bias + ReLU (dropout2 -> identity) --------------------------
    taps2 = jnp.concatenate(
        [h1[:, k * dilation:k * dilation + TW] for k in range(K)], axis=0)
    h2 = jnp.dot(w2_ref[...], taps2, preferred_element_type=jnp.float32)
    h2 = jnp.maximum(h2 + b2_ref[...], 0.0)                    # (C_out_p, TW) f32

    # ---- residual: 1x1 conv (downsample), directly on the bf16 slab ----------
    res = jnp.dot(wd_ref[...], x_b[:, R:R + TW],
                  preferred_element_type=jnp.float32) + bd_ref[...]

    # ---- final ReLU(out + res), single bf16 downcast at the store ------------
    out_ref[...] = jnp.maximum(h2 + res, 0.0).astype(out_ref.dtype)


# ----------------------------------------------------------------------------
# Wrapper
# ----------------------------------------------------------------------------
def temporal_block_forward(x, w1, b1, w2, b2, wd=None, bd=None, *,
                           kernel_size, dilation, padding,
                           target_tile_lanes=512):
    """x: (B, C_in, L); weights in PyTorch Conv1d layout (C_out, C_in, K)."""
    B, C_in, L = x.shape
    C_out = w1.shape[0]
    K, d, P = kernel_size, dilation, padding
    R = (K - 1) * d
    assert R == 2 * P, "kernel requires (K-1)*dilation == 2*padding"

    if wd is None:                               # n_inputs == n_outputs: res = x
        assert C_in == C_out
        wd = jnp.eye(C_out, C_in, dtype=jnp.float32)[:, :, None]
        bd = jnp.zeros((C_out,), jnp.float32)

    # Channel blocks padded to multiples of 16 so bf16 tap pieces are aligned
    # to the packed (16,128) bf16 tile (sublane concat becomes pure layout).
    C_in_p = pl.cdiv(C_in, 16) * 16
    C_out_p = pl.cdiv(C_out, 16) * 16

    # Per-sample frame: [R zeros | L data | R zeros] (halo for both convs).
    F = L + 2 * R
    # Frames per grid step: target ~target_tile_lanes lanes, but keep >= 2 grid
    # steps whenever B >= 2 so both v7x TensorCores get work.
    ft = max(1, target_tile_lanes // F)
    if B >= 2:
        ft = min(ft, pl.cdiv(B, 2))
    num_tiles = pl.cdiv(B, ft)
    B_pad = num_tiles * ft

    TW = pl.cdiv(ft * F, 128) * 128              # output tile width (lane-dense)
    TAIL = pl.cdiv(2 * R, 128) * 128             # per-tile zero tail (>= 2R, 128-mult)
    TWx = TW + TAIL                              # input tile width

    # ---- layout: cast to bf16 FIRST, then frame/flatten (halves the pre-pass
    # bytes), one per-sample pad + one tiny per-tile tail pad.
    xb = x.astype(jnp.bfloat16)
    xb = jnp.pad(xb, ((0, B_pad - B), (0, C_in_p - C_in), (R, R)))   # (B_pad,C_in_p,F)
    xb = jnp.transpose(xb, (1, 0, 2)).reshape(C_in_p, B_pad * F)
    xb = xb.reshape(C_in_p, num_tiles, ft * F)
    xb = jnp.pad(xb, ((0, 0), (0, 0), (0, TWx - ft * F)))
    x_slab = xb.reshape(C_in_p, num_tiles * TWx)

    # Halo mask, identical for every tile: keep columns whose within-frame
    # position lies in [P, P+L); zero the per-tile tail as well.
    cols = jnp.arange(TWx)
    tpos = cols % F
    mask = ((tpos >= P) & (tpos < P + L) & (cols < ft * F))
    mask = mask.astype(jnp.float32).reshape(1, TWx)

    # Per-tap weight matrices concatenated along the contraction dim:
    #   W_cat[o, k*Cp + c] = W[o, c, k]   (matches taps stacked as (K*Cp, width)).
    def cat_weight(w, ci_pad):
        co, ci, kk = w.shape
        wt = jnp.transpose(w, (0, 2, 1))                         # (C_out, K, C_in)
        wt = jnp.pad(wt, ((0, C_out_p - co), (0, 0), (0, ci_pad - ci)))
        return wt.reshape(C_out_p, kk * ci_pad).astype(jnp.bfloat16)

    w1_cat = cat_weight(w1, C_in_p)                              # (C_out_p, K*C_in_p)
    w2_cat = cat_weight(w2, C_out_p)                             # (C_out_p, K*C_out_p)
    wd_m = jnp.pad(wd[:, :, 0],
                   ((0, C_out_p - C_out), (0, C_in_p - C_in))).astype(jnp.bfloat16)
    b1_c = jnp.pad(b1, (0, C_out_p - C_out)).reshape(C_out_p, 1).astype(jnp.float32)
    b2_c = jnp.pad(b2, (0, C_out_p - C_out)).reshape(C_out_p, 1).astype(jnp.float32)
    bd_c = jnp.pad(bd, (0, C_out_p - C_out)).reshape(C_out_p, 1).astype(jnp.float32)

    kernel = functools.partial(_temporal_block_kernel, K=K, dilation=d)

    W1 = TW + R
    flops = num_tiles * 2 * C_out_p * (W1 * K * C_in_p + TW * K * C_out_p
                                       + TW * C_in_p)
    bytes_acc = (C_in_p * num_tiles * TWx * 2 + TWx * 4
                 + C_out_p * (K * C_in_p + K * C_out_p + C_in_p) * 2
                 + 3 * C_out_p * 4
                 + C_out_p * num_tiles * TW * 2)

    out_slab = pl.pallas_call(
        kernel,
        out_shape=jax.ShapeDtypeStruct((C_out_p, num_tiles * TW), jnp.bfloat16),
        grid=(num_tiles,),
        in_specs=[
            pl.BlockSpec((C_in_p, TWx), lambda i: (0, i)),           # x slab tile
            pl.BlockSpec((1, TWx), lambda i: (0, 0)),                # halo mask
            pl.BlockSpec((C_out_p, K * C_in_p), lambda i: (0, 0)),   # w1_cat
            pl.BlockSpec((C_out_p, 1), lambda i: (0, 0)),            # b1
            pl.BlockSpec((C_out_p, K * C_out_p), lambda i: (0, 0)),  # w2_cat
            pl.BlockSpec((C_out_p, 1), lambda i: (0, 0)),            # b2
            pl.BlockSpec((C_out_p, C_in_p), lambda i: (0, 0)),       # wd
            pl.BlockSpec((C_out_p, 1), lambda i: (0, 0)),            # bd
        ],
        out_specs=pl.BlockSpec((C_out_p, TW), lambda i: (0, i)),
        compiler_params=pltpu.CompilerParams(
            dimension_semantics=("parallel",)),
        cost_estimate=pl.CostEstimate(flops=flops, transcendentals=0,
                                      bytes_accessed=bytes_acc),
    )(x_slab, mask, w1_cat, b1_c, w2_cat, b2_c, wd_m, bd_c)

    # Layout plumbing back: per tile keep ft frames, per frame keep L columns.
    y = out_slab.reshape(C_out_p, num_tiles, TW)[:, :, :ft * F]
    y = y.reshape(C_out_p, num_tiles, ft, F)[:, :, :, :L]
    y = y.reshape(C_out_p, B_pad, L)[:C_out, :B, :]
    return jnp.transpose(y, (1, 0, 2)).astype(jnp.float32)        # (B, C_out, L)


# ----------------------------------------------------------------------------
# Pure-JAX reference (f32, for correctness check)
# ----------------------------------------------------------------------------
def temporal_block_ref(x, w1, b1, w2, b2, wd, bd, *, padding, dilation):
    dn = ("NCH", "OIH", "NCH")

    def conv(inp, w, p, d):
        return jax.lax.conv_general_dilated(
            inp, w, window_strides=(1,), padding=[(p, p)],
            rhs_dilation=(d,), dimension_numbers=dn)

    h1 = jnp.maximum(conv(x, w1, padding, dilation) + b1[None, :, None], 0.0)
    h2 = jnp.maximum(conv(h1, w2, padding, dilation) + b2[None, :, None], 0.0)
    res = conv(x, wd, 0, 1) + bd[None, :, None]
    return jnp.maximum(h2 + res, 0.0)


# ----------------------------------------------------------------------------
# Main
# ----------------------------------------------------------------------------
if __name__ == "__main__":
    # Module hyper-parameters (small, consistent with TemporalBlock.__init__).
    n_inputs, n_outputs = 4, 8            # n_inputs != n_outputs -> downsample
    kernel_size, stride, dilation = 3, 1, 1
    B, L = 2, 16                          # batch, sequence length
    input_size = L
    padding = min((kernel_size - 1) * dilation // 2, input_size // 2, 125)  # = 1

    key = jax.random.PRNGKey(0)
    kx, k1, k2, k3, k4, k5, k6 = jax.random.split(key, 7)

    # Deterministic parameter init (weights ~ N(0, 0.01) as in init_weights;
    # biases small deterministic values standing in for PyTorch's default init).
    x = jax.random.normal(kx, (B, n_inputs, L), jnp.float32)
    w1 = 0.01 * jax.random.normal(k1, (n_outputs, n_inputs, kernel_size), jnp.float32)
    b1 = 0.05 * jax.random.normal(k2, (n_outputs,), jnp.float32)
    w2 = 0.01 * jax.random.normal(k3, (n_outputs, n_outputs, kernel_size), jnp.float32)
    b2 = 0.05 * jax.random.normal(k4, (n_outputs,), jnp.float32)
    wd = 0.01 * jax.random.normal(k5, (n_outputs, n_inputs, 1), jnp.float32)
    bd = 0.05 * jax.random.normal(k6, (n_outputs,), jnp.float32)

    out = temporal_block_forward(
        x, w1, b1, w2, b2, wd, bd,
        kernel_size=kernel_size, dilation=dilation, padding=padding)
    out = jax.block_until_ready(out)

    ref = temporal_block_ref(x, w1, b1, w2, b2, wd, bd,
                             padding=padding, dilation=dilation)
    assert out.shape == (B, n_outputs, L)
    # bf16 MXU operands / bf16 output (f32 accumulation) -> bf16-level tolerance.
    assert bool(jnp.allclose(out, ref, atol=5e-3, rtol=5e-2)), (
        f"mismatch vs reference (max abs err "
        f"{float(jnp.max(jnp.abs(out - ref)))})")

    print("KERNEL_OK")
</pallas_src>

<mosaic_0001>
module attributes {stable_mosaic.version = 11 : i64} {
  func.func @_temporal_block_kernel(%arg0: i32, %arg1: memref<16x256xbf16, #tpu.memory_space<vmem>>, %arg2: memref<1x256xf32, #tpu.memory_space<vmem>>, %arg3: memref<16x48xbf16, #tpu.memory_space<vmem>>, %arg4: memref<16x1xf32, #tpu.memory_space<vmem>>, %arg5: memref<16x48xbf16, #tpu.memory_space<vmem>>, %arg6: memref<16x1xf32, #tpu.memory_space<vmem>>, %arg7: memref<16x16xbf16, #tpu.memory_space<vmem>>, %arg8: memref<16x1xf32, #tpu.memory_space<vmem>>, %arg9: memref<16x128xbf16, #tpu.memory_space<vmem>>) attributes {dimension_semantics = [#tpu.dimension_semantics<parallel>], iteration_bounds = array<i64: 2>, scalar_prefetch = 0 : i64, scratch_operands = 0 : i64, tpu.core_type = #tpu.core_type<tc>, window_params = [{transform_indices = @transform_0, window_bounds = array<i64: 16, 256>}, {pipeline_mode = #tpu.pipeline_mode<synchronous>, transform_indices = @transform_1, window_bounds = array<i64: 1, 256>}, {pipeline_mode = #tpu.pipeline_mode<synchronous>, transform_indices = @transform_2, window_bounds = array<i64: 16, 48>}, {pipeline_mode = #tpu.pipeline_mode<synchronous>, transform_indices = @transform_3, window_bounds = array<i64: 16, 1>}, {pipeline_mode = #tpu.pipeline_mode<synchronous>, transform_indices = @transform_4, window_bounds = array<i64: 16, 48>}, {pipeline_mode = #tpu.pipeline_mode<synchronous>, transform_indices = @transform_5, window_bounds = array<i64: 16, 1>}, {pipeline_mode = #tpu.pipeline_mode<synchronous>, transform_indices = @transform_6, window_bounds = array<i64: 16, 16>}, {pipeline_mode = #tpu.pipeline_mode<synchronous>, transform_indices = @transform_7, window_bounds = array<i64: 16, 1>}, {transform_indices = @transform_8, window_bounds = array<i64: 16, 128>}]} {
    %c0 = arith.constant 0 : index
    %c0_0 = arith.constant 0 : index
    %0 = vector.load %arg1[%c0, %c0_0] : memref<16x256xbf16, #tpu.memory_space<vmem>>, vector<16x256xbf16>
    %1 = vector.extract_strided_slice %0 {offsets = [0, 0], sizes = [16, 130], strides = [1, 1]} : vector<16x256xbf16> to vector<16x130xbf16>
    %2 = vector.extract_strided_slice %0 {offsets = [0, 1], sizes = [16, 130], strides = [1, 1]} : vector<16x256xbf16> to vector<16x130xbf16>
    %3 = vector.extract_strided_slice %0 {offsets = [0, 2], sizes = [16, 130], strides = [1, 1]} : vector<16x256xbf16> to vector<16x130xbf16>
    %4 = tpu.concatenate %1, %2, %3 in 0 : vector<16x130xbf16>, vector<16x130xbf16>, vector<16x130xbf16> -> vector<48x130xbf16>
    %c0_1 = arith.constant 0 : index
    %c0_2 = arith.constant 0 : index
    %5 = vector.load %arg3[%c0_1, %c0_2] : memref<16x48xbf16, #tpu.memory_space<vmem>>, vector<16x48xbf16>
    %cst = arith.constant dense<0.000000e+00> : vector<16x130xf32>
    %6 = tpu.matmul %5, %4, %cst {dimension_numbers = #tpu.dot_dimension_numbers<[1], [0], [0], [1], [0, 0, 1, 1], [], []>} : vector<16x48xbf16>, vector<48x130xbf16>, vector<16x130xf32> -> vector<16x130xf32>
    %c0_3 = arith.constant 0 : index
    %c0_4 = arith.constant 0 : index
    %7 = vector.load %arg4[%c0_3, %c0_4] : memref<16x1xf32, #tpu.memory_space<vmem>>, vector<16x1xf32>
    %8 = vector.broadcast %7 : vector<16x1xf32> to vector<16x130xf32>
    %9 = arith.addf %6, %8 : vector<16x130xf32>
    %cst_5 = arith.constant 0.000000e+00 : f32
    %10 = vector.broadcast %cst_5 : f32 to vector<16x130xf32>
    %11 = arith.maximumf %9, %10 : vector<16x130xf32>
    %c0_6 = arith.constant 0 : index
    %c0_7 = arith.constant 0 : index
    %12 = vector.load %arg2[%c0_6, %c0_7] : memref<1x256xf32, #tpu.memory_space<vmem>>, vector<1x130xf32>
    %13 = vector.broadcast %12 : vector<1x130xf32> to vector<16x130xf32>
    %14 = arith.mulf %11, %13 : vector<16x130xf32>
    %15 = arith.truncf %14 : vector<16x130xf32> to vector<16x130xbf16>
    %16 = vector.extract_strided_slice %15 {offsets = [0, 0], sizes = [16, 128], strides = [1, 1]} : vector<16x130xbf16> to vector<16x128xbf16>
    %17 = vector.extract_strided_slice %15 {offsets = [0, 1], sizes = [16, 128], strides = [1, 1]} : vector<16x130xbf16> to vector<16x128xbf16>
    %18 = vector.extract_strided_slice %15 {offsets = [0, 2], sizes = [16, 128], strides = [1, 1]} : vector<16x130xbf16> to vector<16x128xbf16>
    %19 = tpu.concatenate %16, %17, %18 in 0 : vector<16x128xbf16>, vector<16x128xbf16>, vector<16x128xbf16> -> vector<48x128xbf16>
    %c0_8 = arith.constant 0 : index
    %c0_9 = arith.constant 0 : index
    %20 = vector.load %arg5[%c0_8, %c0_9] : memref<16x48xbf16, #tpu.memory_space<vmem>>, vector<16x48xbf16>
    %cst_10 = arith.constant dense<0.000000e+00> : vector<16x128xf32>
    %21 = tpu.matmul %20, %19, %cst_10 {dimension_numbers = #tpu.dot_dimension_numbers<[1], [0], [0], [1], [0, 0, 1, 1], [], []>} : vector<16x48xbf16>, vector<48x128xbf16>, vector<16x128xf32> -> vector<16x128xf32>
    %c0_11 = arith.constant 0 : index
    %c0_12 = arith.constant 0 : index
    %22 = vector.load %arg6[%c0_11, %c0_12] : memref<16x1xf32, #tpu.memory_space<vmem>>, vector<16x1xf32>
    %23 = vector.broadcast %22 : vector<16x1xf32> to vector<16x128xf32>
    %24 = arith.addf %21, %23 : vector<16x128xf32>
    %cst_13 = arith.constant 0.000000e+00 : f32
    %25 = vector.broadcast %cst_13 : f32 to vector<16x128xf32>
    %26 = arith.maximumf %24, %25 : vector<16x128xf32>
    %c0_14 = arith.constant 0 : index
    %c0_15 = arith.constant 0 : index
    %27 = vector.load %arg7[%c0_14, %c0_15] : memref<16x16xbf16, #tpu.memory_space<vmem>>, vector<16x16xbf16>
    %28 = vector.extract_strided_slice %0 {offsets = [0, 2], sizes = [16, 128], strides = [1, 1]} : vector<16x256xbf16> to vector<16x128xbf16>
    %cst_16 = arith.constant dense<0.000000e+00> : vector<16x128xf32>
    %29 = tpu.matmul %27, %28, %cst_16 {dimension_numbers = #tpu.dot_dimension_numbers<[1], [0], [0], [1], [0, 0, 1, 1], [], []>} : vector<16x16xbf16>, vector<16x128xbf16>, vector<16x128xf32> -> vector<16x128xf32>
    %c0_17 = arith.constant 0 : index
    %c0_18 = arith.constant 0 : index
    %30 = vector.load %arg8[%c0_17, %c0_18] : memref<16x1xf32, #tpu.memory_space<vmem>>, vector<16x1xf32>
    %31 = vector.broadcast %30 : vector<16x1xf32> to vector<16x128xf32>
    %32 = arith.addf %29, %31 : vector<16x128xf32>
    %33 = arith.addf %26, %32 : vector<16x128xf32>
    %cst_19 = arith.constant 0.000000e+00 : f32
    %34 = vector.broadcast %cst_19 : f32 to vector<16x128xf32>
    %35 = arith.maximumf %33, %34 : vector<16x128xf32>
    %36 = arith.truncf %35 : vector<16x128xf32> to vector<16x128xbf16>
    %c0_20 = arith.constant 0 : index
    %c0_21 = arith.constant 0 : index
    %37 = vector.load %arg9[%c0_20, %c0_21] : memref<16x128xbf16, #tpu.memory_space<vmem>>, vector<16x128xbf16>
    tpu.vector_store %arg9[%c0_20, %c0_21], %36 {strides = array<i32>} : memref<16x128xbf16, #tpu.memory_space<vmem>>, vector<16x128xbf16>,
    return
  }
  func.func @transform_0(%arg0: i32) -> (i32, i32) {
    %c0_i32 = arith.constant 0 : i32
    %c0_i32_0 = arith.constant 0 : i32
    return %c0_i32, %arg0 : i32, i32
  }
  func.func @transform_1(%arg0: i32) -> (i32, i32) {
    %c0_i32 = arith.constant 0 : i32
    %c0_i32_0 = arith.constant 0 : i32
    %c0_i32_1 = arith.constant 0 : i32
    return %c0_i32, %c0_i32_0 : i32, i32
  }
  func.func @transform_2(%arg0: i32) -> (i32, i32) {
    %c0_i32 = arith.constant 0 : i32
    %c0_i32_0 = arith.constant 0 : i32
    %c0_i32_1 = arith.constant 0 : i32
    return %c0_i32, %c0_i32_0 : i32, i32
  }
  func.func @transform_3(%arg0: i32) -> (i32, i32) {
    %c0_i32 = arith.constant 0 : i32
    %c0_i32_0 = arith.constant 0 : i32
    %c0_i32_1 = arith.constant 0 : i32
    return %c0_i32, %c0_i32_0 : i32, i32
  }
  func.func @transform_4(%arg0: i32) -> (i32, i32) {
    %c0_i32 = arith.constant 0 : i32
    %c0_i32_0 = arith.constant 0 : i32
    %c0_i32_1 = arith.constant 0 : i32
    return %c0_i32, %c0_i32_0 : i32, i32
  }
  func.func @transform_5(%arg0: i32) -> (i32, i32) {
    %c0_i32 = arith.constant 0 : i32
    %c0_i32_0 = arith.constant 0 : i32
    %c0_i32_1 = arith.constant 0 : i32
    return %c0_i32, %c0_i32_0 : i32, i32
  }
  func.func @transform_6(%arg0: i32) -> (i32, i32) {
    %c0_i32 = arith.constant 0 : i32
    %c0_i32_0 = arith.constant 0 : i32
    %c0_i32_1 = arith.constant 0 : i32
    return %c0_i32, %c0_i32_0 : i32, i32
  }
  func.func @transform_7(%arg0: i32) -> (i32, i32) {
    %c0_i32 = arith.constant 0 : i32
    %c0_i32_0 = arith.constant 0 : i32
    %c0_i32_1 = arith.constant 0 : i32
    return %c0_i32, %c0_i32_0 : i32, i32
  }
  func.func @transform_8(%arg0: i32) -> (i32, i32) {
    %c0_i32 = arith.constant 0 : i32
    %c0_i32_0 = arith.constant 0 : i32
    return %c0_i32, %arg0 : i32, i32
  }
}

</mosaic_0001>

<llo_original>
// kernel: tpu_custom_call.1
$region0: #{tpu_custom_call.1}
  #allocation0 [shape = 'u32[]', space=smem, size = 0x4, offset = 0x4, fixed_abs, tag = 'smem constant byte address 0x4 - core index']
  #allocation1 [shape = 'u32[72,128]{1,0:T(1,128)}', space=vmem, size = 0x9000, scoped, tag = 'internal scratch']
  %s0 = inlined_call_operand.vmem [shape: bf16[16,512], index: 0, kind: input, shape index: {}]
  %s1 = inlined_call_operand.hbm [shape: f32[1,256], index: 1, kind: input, shape index: {}]
  %s2 = inlined_call_operand.vmem [shape: bf16[16,48], index: 2, kind: input, shape index: {}]
  %s3 = inlined_call_operand.vmem [shape: f32[16,1], index: 3, kind: input, shape index: {}]
  %s4 = inlined_call_operand.vmem [shape: bf16[16,48], index: 4, kind: input, shape index: {}]
  %s5 = inlined_call_operand.vmem [shape: f32[16,1], index: 5, kind: input, shape index: {}]
  %s6 = inlined_call_operand.vmem [shape: bf16[16,16], index: 6, kind: input, shape index: {}]
  %s7 = inlined_call_operand.vmem [shape: f32[16,1], index: 7, kind: input, shape index: {}]
  %s8 = inlined_call_operand.hbm [shape: bf16[16,256], index: 8, kind: output, shape index: {}]
  %s9 = sld [smem:[#allocation0]]
  $region107: #{tpu_custom_call.1} parent=0
    _
  %s11 = ssub.s32 1, %s9
  %s12 = scalar_select 0, %s11, %s9
  $region1: #{tpu_custom_call.1} parent=0
    #allocation2 [shape = 'u8[16384]{0}', space=vmem, size = 0x4000, scoped, tag = 'input window, operand 0']
    #allocation3 [shape = 'u8[1024]{0}', space=vmem, size = 0x400, scoped, tag = 'input window, operand 1, single buffered']
    #allocation4 [shape = 's32[2]{0}', space=sflag, size = 0x8, scoped, tag = 'scoped memory for tpu_custom_call.1']
    #allocation5 [shape = 's32[2]{0}', space=sflag, size = 0x8, scoped, tag = 'scoped memory for tpu_custom_call.1']
    #allocation6 [shape = 'u8[8192]{0}', space=vmem, size = 0x2000, scoped, tag = 'output window, operand 0']
    %13 = vsyncpa [#allocation4], 0
    %14 = vsyncpa [#allocation5], 0
    %s15 = scalar_lea.sflag [#allocation5], 1
    %16 = vsyncpa %s15, 0
    loop: start=0, step=1, limit=4
    $region2: #{tpu_custom_call.1} parent=1 // loop_pre_header
      _
    $region3: #{tpu_custom_call.1} parent=1 // loop_header
      %s18 = sphi 0, %s22
      %p19 = scmp.ge.s32.totalorder %s18, 4
      %s28 = sphi 0, %s30
      %s31 = sphi 0, %s28
      %s32 = sphi 0, %s31
      %s48 = sphi 0, %s32
      %s52 = sphi 0, %s52
      %s54 = sphi 0, %s52
      %s55 = sphi 0, %s54
      %s69 = sphi 0, %s55
      %s73 = sphi 0, %s73
      %s75 = sphi 0, %s73
      %s76 = sphi 0, %s75
      %s90 = sphi 0, %s76
      %s94 = sphi 0, %s94
      %s96 = sphi 0, %s94
      %s97 = sphi 0, %s96
      %s111 = sphi 0, %s97
      %s115 = sphi 0, %s115
      %s117 = sphi 0, %s115
      %s118 = sphi 0, %s117
      %s132 = sphi 0, %s118
      %s136 = sphi 0, %s136
      %s138 = sphi 0, %s136
      %s139 = sphi 0, %s138
      %s153 = sphi 0, %s139
      %s157 = sphi 0, %s157
      %s159 = sphi 0, %s157
      %s160 = sphi 0, %s159
      %s174 = sphi 0, %s160
      %s178 = sphi 0, %s178
      %s180 = sphi 0, %s178
      %s181 = sphi 0, %s180
      %s195 = sphi 0, %s181
      %s201 = sphi 0, %s203
      %s204 = sphi 0, %s201
      %s205 = sphi 0, %s204
      %s221 = sphi 0, %s205
    $region4: #{tpu_custom_call.1} parent=1 // loop_header_branch
      %21 = sbr.rel (%p19) target = $region8
    $region5: #{tpu_custom_call.1} parent=1 // loop_body
      %s23 = ssub.s32 %s18, 1
      %s24 = ssub.s32 %s18, 2
      %s25 = sadd.s32 %s18, 1
      %s26 = ssub.s32 %s18, %s25
      %p27 = scmp.eq.s32.totalorder %s26, 0
      %s29 = sadd.s32 %s28, 1
      %s30 = scalar_select %p27, %s28, %s29
      %p33 = pneg %p27
      %p34 = scmp.eq.s32.totalorder %s18, 1
      %p35 = por %p33, %p34
      %p36 = scmp.ne.s32.totalorder %s28, %s31
      %p37 = scmp.eq.s32.totalorder %s18, 0
      %p38 = por %p36, %p37
      %p39 = scmp.ne.s32.totalorder %s28, %s31
      %p40 = scmp.eq.s32.totalorder %s23, 1
      %p41 = por %p39, %p40
      %p42 = scmp.ne.s32.totalorder %s31, %s32
      %p43 = scmp.eq.s32.totalorder %s23, 0
      %p44 = por %p42, %p43
      %p45 = scmp.ne.s32.totalorder %s31, %s32
      %p46 = scmp.eq.s32.totalorder %s24, 1
      %p47 = por %p45, %p46
      %p49 = scmp.ne.s32.totalorder %s32, %s48
      %p50 = scmp.eq.s32.totalorder %s24, 0
      %p51 = por %p49, %p50
      %s53 = sadd.s32 %s52, 1
      %p56 = scmp.eq.s32.totalorder %s18, 1
      %p57 = scmp.ne.s32.totalorder %s52, %s54
      %p58 = scmp.eq.s32.totalorder %s18, 0
      %p59 = por %p57, %p58
      %p60 = scmp.ne.s32.totalorder %s52, %s54
      %p61 = scmp.eq.s32.totalorder %s23, 1
      %p62 = por %p60, %p61
      %p63 = scmp.ne.s32.totalorder %s54, %s55
      %p64 = scmp.eq.s32.totalorder %s23, 0
      %p65 = por %p63, %p64
      %p66 = scmp.ne.s32.totalorder %s54, %s55
      %p67 = scmp.eq.s32.totalorder %s24, 1
      %p68 = por %p66, %p67
      %p70 = scmp.ne.s32.totalorder %s55, %s69
      %p71 = scmp.eq.s32.totalorder %s24, 0
      %p72 = por %p70, %p71
      %s74 = sadd.s32 %s73, 1
      %p77 = scmp.eq.s32.totalorder %s18, 1
      %p78 = scmp.ne.s32.totalorder %s73, %s75
      %p79 = scmp.eq.s32.totalorder %s18, 0
      %p80 = por %p78, %p79
      %p81 = scmp.ne.s32.totalorder %s73, %s75
      %p82 = scmp.eq.s32.totalorder %s23, 1
      %p83 = por %p81, %p82
      %p84 = scmp.ne.s32.totalorder %s75, %s76
      %p85 = scmp.eq.s32.totalorder %s23, 0
      %p86 = por %p84, %p85
      %p87 = scmp.ne.s32.totalorder %s75, %s76
      %p88 = scmp.eq.s32.totalorder %s24, 1
      %p89 = por %p87, %p88
      %p91 = scmp.ne.s32.totalorder %s76, %s90
      %p92 = scmp.eq.s32.totalorder %s24, 0
      %p93 = por %p91, %p92
      %s95 = sadd.s32 %s94, 1
      %p98 = scmp.eq.s32.totalorder %s18, 1
      %p99 = scmp.ne.s32.totalorder %s94, %s96
      %p100 = scmp.eq.s32.totalorder %s18, 0
      %p101 = por %p99, %p100
      %p102 = scmp.ne.s32.totalorder %s94, %s96
      %p103 = scmp.eq.s32.totalorder %s23, 1
      %p104 = por %p102, %p103
      %p105 = scmp.ne.s32.totalorder %s96, %s97
      %p106 = scmp.eq.s32.totalorder %s23, 0
      %p107 = por %p105, %p106
      %p108 = scmp.ne.s32.totalorder %s96, %s97
      %p109 = scmp.eq.s32.totalorder %s24, 1
      %p110 = por %p108, %p109
      %p112 = scmp.ne.s32.totalorder %s97, %s111
      %p113 = scmp.eq.s32.totalorder %s24, 0
      %p114 = por %p112, %p113
      %s116 = sadd.s32 %s115, 1
      %p119 = scmp.eq.s32.totalorder %s18, 1
      %p120 = scmp.ne.s32.totalorder %s115, %s117
      %p121 = scmp.eq.s32.totalorder %s18, 0
      %p122 = por %p120, %p121
      %p123 = scmp.ne.s32.totalorder %s115, %s117
      %p124 = scmp.eq.s32.totalorder %s23, 1
      %p125 = por %p123, %p124
      %p126 = scmp.ne.s32.totalorder %s117, %s118
      %p127 = scmp.eq.s32.totalorder %s23, 0
      %p128 = por %p126, %p127
      %p129 = scmp.ne.s32.totalorder %s117, %s118
      %p130 = scmp.eq.s32.totalorder %s24, 1
      %p131 = por %p129, %p130
      %p133 = scmp.ne.s32.totalorder %s118, %s132
      %p134 = scmp.eq.s32.totalorder %s24, 0
      %p135 = por %p133, %p134
      %s137 = sadd.s32 %s136, 1
      %p140 = scmp.eq.s32.totalorder %s18, 1
      %p141 = scmp.ne.s32.totalorder %s136, %s138
      %p142 = scmp.eq.s32.totalorder %s18, 0
      %p143 = por %p141, %p142
      %p144 = scmp.ne.s32.totalorder %s136, %s138
      %p145 = scmp.eq.s32.totalorder %s23, 1
      %p146 = por %p144, %p145
      %p147 = scmp.ne.s32.totalorder %s138, %s139
      %p148 = scmp.eq.s32.totalorder %s23, 0
      %p149 = por %p147, %p148
      %p150 = scmp.ne.s32.totalorder %s138, %s139
      %p151 = scmp.eq.s32.totalorder %s24, 1
      %p152 = por %p150, %p151
      %p154 = scmp.ne.s32.totalorder %s139, %s153
      %p155 = scmp.eq.s32.totalorder %s24, 0
      %p156 = por %p154, %p155
      %s158 = sadd.s32 %s157, 1
      %p161 = scmp.eq.s32.totalorder %s18, 1
      %p162 = scmp.ne.s32.totalorder %s157, %s159
      %p163 = scmp.eq.s32.totalorder %s18, 0
      %p164 = por %p162, %p163
      %p165 = scmp.ne.s32.totalorder %s157, %s159
      %p166 = scmp.eq.s32.totalorder %s23, 1
      %p167 = por %p165, %p166
      %p168 = scmp.ne.s32.totalorder %s159, %s160
      %p169 = scmp.eq.s32.totalorder %s23, 0
      %p170 = por %p168, %p169
      %p171 = scmp.ne.s32.totalorder %s159, %s160
      %p172 = scmp.eq.s32.totalorder %s24, 1
      %p173 = por %p171, %p172
      %p175 = scmp.ne.s32.totalorder %s160, %s174
      %p176 = scmp.eq.s32.totalorder %s24, 0
      %p177 = por %p175, %p176
      %s179 = sadd.s32 %s178, 1
      %p182 = scmp.eq.s32.totalorder %s18, 1
      %p183 = scmp.ne.s32.totalorder %s178, %s180
      %p184 = scmp.eq.s32.totalorder %s18, 0
      %p185 = por %p183, %p184
      %p186 = scmp.ne.s32.totalorder %s178, %s180
      %p187 = scmp.eq.s32.totalorder %s23, 1
      %p188 = por %p186, %p187
      %p189 = scmp.ne.s32.totalorder %s180, %s181
      %p190 = scmp.eq.s32.totalorder %s23, 0
      %p191 = por %p189, %p190
      %p192 = scmp.ne.s32.totalorder %s180, %s181
      %p193 = scmp.eq.s32.totalorder %s24, 1
      %p194 = por %p192, %p193
      %p196 = scmp.ne.s32.totalorder %s181, %s195
      %p197 = scmp.eq.s32.totalorder %s24, 0
      %p198 = por %p196, %p197
      %s199 = ssub.s32 %s18, %s25
      %p200 = scmp.eq.s32.totalorder %s199, 0
      %s202 = sadd.s32 %s201, 1
      %s203 = scalar_select %p200, %s201, %s202
      %p206 = pneg %p200
      %p207 = scmp.eq.s32.totalorder %s18, 1
      %p208 = por %p206, %p207
      %p209 = scmp.ne.s32.totalorder %s201, %s204
      %p210 = scmp.eq.s32.totalorder %s18, 0
      %p211 = por %p209, %p210
      %p212 = scmp.ne.s32.totalorder %s201, %s204
      %p213 = scmp.eq.s32.totalorder %s23, 1
      %p214 = por %p212, %p213
      %p215 = scmp.ne.s32.totalorder %s204, %s205
      %p216 = scmp.eq.s32.totalorder %s23, 0
      %p217 = por %p215, %p216
      %p218 = scmp.ne.s32.totalorder %s204, %s205
      %p219 = scmp.eq.s32.totalorder %s24, 1
      %p220 = por %p218, %p219
      %p222 = scmp.ne.s32.totalorder %s205, %s221
      %p223 = scmp.eq.s32.totalorder %s24, 0
      %p224 = por %p222, %p223
      %p225 = scmp.le.s32.totalorder 1, %s18
      %p226 = scmp.lt.s32.totalorder %s18, 3
      %p227 = pnand %p225, %p226
      %p228 = pneg %p227
      // Predicated region
      $region9: #{tpu_custom_call.1} parent=5 // pred_check
        _
      $region10: #{tpu_custom_call.1} parent=5 // pred_check_branch
        %230 = sbr.rel (%p227) target = $region12
      $region11: #{tpu_custom_call.1} parent=5 // pred_region
        %s231 = ssub.s32 %s18, 1
        // Predicated region
        $region13: #{tpu_custom_call.1} parent=11 // pred_check
          %p232 = pneg %p65
        $region14: #{tpu_custom_call.1} parent=11 // pred_check_branch
          %234 = sbr.rel (%p232) target = $region16
        $region15: #{tpu_custom_call.1} parent=11 // pred_region
          %236 = vsyncadd [#allocation4], 0
          %s238 = sshll.u32 %s1, 4
          %s239 = int_to_ptr.hbm [resolvable:$true] %s238
          %s240 = sshll.u32 [#allocation3], 4
          %s241 = int_to_ptr.vmem [resolvable:$true] %s240
          %243 = dma.hbm_to_vmem [thread:$0]  %s239, 32, %s241, [#allocation4]
        $region16: #{tpu_custom_call.1} parent=11 // pred_fallthru
          _
        // Predicated region
        $region17: #{tpu_custom_call.1} parent=11 // pred_check
          %p244 = pneg %p86
        $region18: #{tpu_custom_call.1} parent=11 // pred_check_branch
          %246 = sbr.rel (%p244) target = $region20
        $region19: #{tpu_custom_call.1} parent=11 // pred_region
          _
        $region20: #{tpu_custom_call.1} parent=11 // pred_fallthru
          _
        // Predicated region
        $region21: #{tpu_custom_call.1} parent=11 // pred_check
          %p247 = pneg %p107
        $region22: #{tpu_custom_call.1} parent=11 // pred_check_branch
          %249 = sbr.rel (%p247) target = $region24
        $region23: #{tpu_custom_call.1} parent=11 // pred_region
          _
        $region24: #{tpu_custom_call.1} parent=11 // pred_fallthru
          _
        // Predicated region
        $region25: #{tpu_custom_call.1} parent=11 // pred_check
          %p250 = pneg %p128
        $region26: #{tpu_custom_call.1} parent=11 // pred_check_branch
          %252 = sbr.rel (%p250) target = $region28
        $region27: #{tpu_custom_call.1} parent=11 // pred_region
          _
        $region28: #{tpu_custom_call.1} parent=11 // pred_fallthru
          _
        // Predicated region
        $region29: #{tpu_custom_call.1} parent=11 // pred_check
          %p253 = pneg %p149
        $region30: #{tpu_custom_call.1} parent=11 // pred_check_branch
          %255 = sbr.rel (%p253) target = $region32
        $region31: #{tpu_custom_call.1} parent=11 // pred_region
          _
        $region32: #{tpu_custom_call.1} parent=11 // pred_fallthru
          _
        // Predicated region
        $region33: #{tpu_custom_call.1} parent=11 // pred_check
          %p256 = pneg %p170
        $region34: #{tpu_custom_call.1} parent=11 // pred_check_branch
          %258 = sbr.rel (%p256) target = $region36
        $region35: #{tpu_custom_call.1} parent=11 // pred_region
          _
        $region36: #{tpu_custom_call.1} parent=11 // pred_fallthru
          _
        // Predicated region
        $region37: #{tpu_custom_call.1} parent=11 // pred_check
          %p259 = pneg %p191
        $region38: #{tpu_custom_call.1} parent=11 // pred_check_branch
          %261 = sbr.rel (%p259) target = $region40
        $region39: #{tpu_custom_call.1} parent=11 // pred_region
          _
        $region40: #{tpu_custom_call.1} parent=11 // pred_fallthru
          _
      $region12: #{tpu_custom_call.1} parent=5 // pred_fallthru
        _
      %p262 = scmp.lt.s32.totalorder %s18, 2
      // Predicated region
      $region41: #{tpu_custom_call.1} parent=5 // pred_check
        %p263 = pneg %p262
      $region42: #{tpu_custom_call.1} parent=5 // pred_check_branch
        %265 = sbr.rel (%p263) target = $region44
      $region43: #{tpu_custom_call.1} parent=5 // pred_region
        // Predicated region
        $region45: #{tpu_custom_call.1} parent=43 // pred_check
          %p266 = pneg %p38
        $region46: #{tpu_custom_call.1} parent=43 // pred_check_branch
          %268 = sbr.rel (%p266) target = $region48
        $region47: #{tpu_custom_call.1} parent=43 // pred_region
          %s269 = sand.u32 %s28, 1
          %s270 = sand.u32 %s28, 1
          %s271 = smul.addr %s270, 16
          %s272 = scalar_lea.vmem [#allocation2], %s271
          %s273 = smul.u32 2, %s18
          %s274 = smul.addr %s273, 4
          %s275 = scalar_lea.vmem %s0, %s274
          // Predicated region
          $region49: #{tpu_custom_call.1} parent=47 // pred_check
            _
          $region50: #{tpu_custom_call.1} parent=47 // pred_check_branch
            %277 = sbr.rel (0) target = $region52
          $region51: #{tpu_custom_call.1} parent=47 // pred_region
            // Predicated region
            $region53: #{tpu_custom_call.1} parent=51 // pred_check
              _
            $region54: #{tpu_custom_call.1} parent=51 // pred_check_branch
              %279 = sbr.rel (0) target = $region56
            $region55: #{tpu_custom_call.1} parent=51 // pred_region
              // Predicated region
              $region68: #{tpu_custom_call.1} parent=55 // pred_check
                _
              $region69: #{tpu_custom_call.1} parent=55 // pred_check_branch
                %297 = sbr.rel (0) target = $region71
              $region70: #{tpu_custom_call.1} parent=55 // pred_region
                loop: start=0, step=1, limit=1
                $region72: #{tpu_custom_call.1} parent=70 // loop_pre_header
                  _
                $region73: #{tpu_custom_call.1} parent=70 // loop_header
                  %s299 = sphi 0, %s303
                  %p300 = scmp.ge.s32.totalorder %s299, 1
                  %s304 = sphi %s275, %s275
                  %s305 = sphi %s272, %s272
                $region74: #{tpu_custom_call.1} parent=70 // loop_header_branch
                  %302 = sbr.rel (%p300) target = $region78
                $region75: #{tpu_custom_call.1} parent=70 // loop_body
                  %v306 = vld [vmem:[%s304] sm:$0xff]
                  %307 = vst [vmem:[%s305] sm:$0xff] %v306
                  %v308 = vld [vmem:[%s304 + $0x10] sm:$0xff]
                  %309 = vst [vmem:[%s305 + $0x8] sm:$0xff] %v308
                $region76: #{tpu_custom_call.1} parent=70 // loop_footer
                  %s303 = sadd.s32 1, %s299
                $region77: #{tpu_custom_call.1} parent=70 // loop_footer_branch
                  %298 = sbr.rel target = $region73
                $region78: #{tpu_custom_call.1} parent=70 // loop_exit
                  _
              $region71: #{tpu_custom_call.1} parent=55 // pred_fallthru
                _
              // Predicated region
              $region79: #{tpu_custom_call.1} parent=55 // pred_check
                _
              $region80: #{tpu_custom_call.1} parent=55 // pred_check_branch
                %311 = sbr.rel target = $region82
              $region81: #{tpu_custom_call.1} parent=55 // pred_region
                _
              $region82: #{tpu_custom_call.1} parent=55 // pred_fallthru
                _
            $region56: #{tpu_custom_call.1} parent=51 // pred_fallthru
              _
            // Predicated region
            $region57: #{tpu_custom_call.1} parent=51 // pred_check
              _
            $region58: #{tpu_custom_call.1} parent=51 // pred_check_branch
              %281 = sbr.rel target = $region60
            $region59: #{tpu_custom_call.1} parent=51 // pred_region
              %s283 = ssub.s32 256, 1
              loop: start=0, step=1, limit=1
              $region61: #{tpu_custom_call.1} parent=59 // loop_pre_header
                _
              $region62: #{tpu_custom_call.1} parent=59 // loop_header
                %s285 = sphi 0, %s289
                %p286 = scmp.ge.s32.totalorder %s285, 1
                %s290 = sphi %s275, %s275
                %s291 = sphi %s272, %s272
              $region63: #{tpu_custom_call.1} parent=59 // loop_header_branch
                %288 = sbr.rel (%p286) target = $region67
              $region64: #{tpu_custom_call.1} parent=59 // loop_body
                %v292 = vld [vmem:[%s290] sm:%s283]
                %293 = vst [vmem:[%s291] sm:%s283] %v292
                %v294 = vld [vmem:[%s290 + $0x10] sm:%s283]
                %295 = vst [vmem:[%s291 + $0x8] sm:%s283] %v294
              $region65: #{tpu_custom_call.1} parent=59 // loop_footer
                %s289 = sadd.s32 1, %s285
              $region66: #{tpu_custom_call.1} parent=59 // loop_footer_branch
                %284 = sbr.rel target = $region62
              $region67: #{tpu_custom_call.1} parent=59 // loop_exit
                _
            $region60: #{tpu_custom_call.1} parent=51 // pred_fallthru
              _
          $region52: #{tpu_custom_call.1} parent=47 // pred_fallthru
            _
          %312 = vnop
        $region48: #{tpu_custom_call.1} parent=43 // pred_fallthru
          _
      $region44: #{tpu_custom_call.1} parent=5 // pred_fallthru
        _
      %p313 = scmp.le.s32.totalorder 1, %s18
      %p314 = scmp.lt.s32.totalorder %s18, 3
      %p315 = pnand %p313, %p314
      %p316 = pneg %p315
      // Predicated region
      $region83: #{tpu_custom_call.1} parent=5 // pred_check
        _
      $region84: #{tpu_custom_call.1} parent=5 // pred_check_branch
        %318 = sbr.rel (%p315) target = $region86
      $region85: #{tpu_custom_call.1} parent=5 // pred_region
        %s319 = ssub.s32 %s18, 1
        %s320 = sand.u32 %s31, 1
        %s321 = sand.u32 %s31, 1
        %s322 = smul.addr %s321, 16
        %s323 = scalar_lea.vmem [#allocation2], %s322
        // Predicated region
        $region87: #{tpu_custom_call.1} parent=85 // pred_check
          %p324 = pneg %p44
        $region88: #{tpu_custom_call.1} parent=85 // pred_check_branch
          %326 = sbr.rel (%p324) target = $region90
        $region89: #{tpu_custom_call.1} parent=85 // pred_region
          _
        $region90: #{tpu_custom_call.1} parent=85 // pred_fallthru
          _
        // Predicated region
        $region91: #{tpu_custom_call.1} parent=85 // pred_check
          %p327 = pneg %p65
        $region92: #{tpu_custom_call.1} parent=85 // pred_check_branch
          %329 = sbr.rel (%p327) target = $region94
        $region93: #{tpu_custom_call.1} parent=85 // pred_region
          %331 = dma.done [#allocation4], 32
        $region94: #{tpu_custom_call.1} parent=85 // pred_fallthru
          _
        %s332 = sand.u32 %s31, 1
        %s333 = sand.u32 %s31, 1
        %s334 = smul.addr %s333, 16
        %s335 = scalar_lea.vmem [#allocation2], %s334
        %p336 = pneg %p44
        %p337 = pneg %p41
        %p338 = pneg %p65
        %p339 = pneg %p62
        %p340 = pneg %p86
        %p341 = pneg %p83
        %p342 = pneg %p107
        %p343 = pneg %p104
        %p344 = pneg %p128
        %p345 = pneg %p125
        %p346 = pneg %p149
        %p347 = pneg %p146
        %p348 = pneg %p170
        %p349 = pneg %p167
        %p350 = pneg %p191
        %p351 = pneg %p188
        %p352 = pneg %p217
        %p353 = pneg %p214
        %s354 = sand.u32 %s204, 1
        %s355 = scalar_lea.sflag [#allocation5], %s354
        %s356 = sand.u32 %s204, 1
        %s357 = smul.addr %s356, 8
        %s358 = scalar_lea.vmem [#allocation6], %s357
        %s359 = smul.u32 2, %s23
        %v361 = vld [vmem:[%s323] sm:$0xff]
        %v362 = vld [vmem:[%s323 + $0x8] sm:$0xff]
        %v365 = vunpack.c.l.b16 %v361
        %v366 = vunpack.c.h.b16 %v361
        %v367 = vunpack.c.l.b16 %v362
        %v368 = vunpack.c.h.b16 %v362
        %v369 = vpack.c.b16 %v367, %v365
        %v370 = vpack.c.b16 %v368, %v366
        %373 = vrot.lane.b32.xlu0 %v369, 127
        %v374 = vpop.permute.xlu0 %373
        %375 = vrot.lane.b32.xlu0 %v370, 127
        %v376 = vpop.permute.xlu0 %375
        %vm377 = vcmask 1039360
        %v378 = vsel %vm377, %v374, %v376
        %381 = vrot.lane.b32.xlu0 %v369, 126
        %v382 = vpop.permute.xlu0 %381
        %383 = vrot.lane.b32.xlu0 %v370, 126
        %v384 = vpop.permute.xlu0 %383
        %vm385 = vcmask 1031168
        %v386 = vsel %vm385, %v382, %v384
        %v389 = vld [vmem:[%s2] sm:$0xf]
        %v390 = vld [vmem:[%s2 + $0x4] sm:$0xf]
        %v391 = vld [vmem:[%s3] sm:$0xff]
        %v392 = vld [vmem:[%s3 + $0x8] sm:$0xff]
        %394 = vset.pattern.permute.xlu0 0
        %395 = vperm.xlu0 %394, %v391
        %v396 = vpop.permute.xlu0 %395
        %399 = vset.pattern.permute.xlu0 0
        %400 = vperm.xlu0 %399, %v392
        %v401 = vpop.permute.xlu0 %400
        %v405 = vunpack.c.l.b16 %v389
        %v406 = vunpack.c.l.b16 %v390
        %v407 = vpack.c.b16 %v406, %v405
        %vm408 = vcmask 392192
        %v410 = vsel %vm408, %v407, 0
        %412 = vmatpush.bf16.msra.mxu0 0
        %413 = vmatpush.bf16.msra.mxu0 0
        %414 = vmatpush.bf16.msra.mxu0 0
        %415 = vmatpush.bf16.msra.mxu0 0
        %416 = vmatpush.bf16.msra.mxu0 0
        %417 = vmatpush.bf16.msra.mxu0 %v386
        %418 = vmatpush.bf16.msra.mxu0 %v378
        %419 = vmatpush.bf16.msra.mxu0 %v369
        %420 = vmatmul.bf16.gmra.mxu0 %v410
        %v421 = vpop.f32.mrf.mxu0
        %v422 = vadd.f32 %v396, %v421
        %v423 = vpop.f32.mrf.mxu0
        %v424 = vadd.f32 %v401, %v423
        %425 = vdwg.mxu0
        %426 = vmatpush.bf16.msra.mxu0 0
        %427 = vmatpush.bf16.msra.mxu0 0
        %428 = vmatpush.bf16.msra.mxu0 0
        %429 = vmatpush.bf16.msra.mxu0 0
        %430 = vmatpush.bf16.msra.mxu0 0
        %431 = vmatpush.bf16.msra.mxu0 %v384
        %432 = vmatpush.bf16.msra.mxu0 %v376
        %433 = vmatpush.bf16.msra.mxu0 %v370
        %434 = vmatmul.bf16.gmra.mxu0 %v410
        %v435 = vpop.f32.mrf.mxu0
        %v436 = vadd.f32 %v396, %v435
        %v437 = vpop.f32.mrf.mxu0
        %v438 = vadd.f32 %v401, %v437
        %439 = vdwg.mxu0
        %v440 = vmax.f32 %v422, 0.0
        %v441 = vmax.f32 %v436, 0.0
        %v442 = vmax.f32 %v424, 0.0
        %v443 = vmax.f32 %v438, 0.0
        %v444 = vld [vmem:[#allocation3] sm:$0x3]
        %v446 = vperm.slane %v444, 0
        %v447 = vperm.slane %v444, 1
        %v450 = vmul.f32 %v440, %v446
        %v451 = vmul.f32 %v441, %v447
        %v452 = vmul.f32 %v442, %v446
        %v453 = vmul.f32 %v443, %v447
        %v454 = vpack.c.bf16 %v451, %v450
        %v455 = vpack.c.bf16 %v453, %v452
        %v458 = vunpack.c.l.b16 %v454
        %v459 = vunpack.c.l.b16 %v455
        %v460 = vpack.c.b16 %v459, %v458
        %v462 = vunpack.c.h.b16 %v454
        %v463 = vunpack.c.h.b16 %v455
        %v464 = vpack.c.b16 %v463, %v462
        %465 = vrot.lane.b32.xlu0 %v460, 127
        %v466 = vpop.permute.xlu0 %465
        %467 = vrot.lane.b32.xlu0 %v464, 127
        %v468 = vpop.permute.xlu0 %467
        %v469 = vsel %vm377, %v466, %v468
        %471 = vrot.lane.b32.xlu0 %v460, 126
        %v472 = vpop.permute.xlu0 %471
        %473 = vrot.lane.b32.xlu0 %v464, 126
        %v474 = vpop.permute.xlu0 %473
        %v475 = vsel %vm385, %v472, %v474
        %v477 = vld [vmem:[%s4] sm:$0xf]
        %v478 = vld [vmem:[%s4 + $0x4] sm:$0xf]
        %v479 = vld [vmem:[%s5] sm:$0xff]
        %v480 = vld [vmem:[%s5 + $0x8] sm:$0xff]
        %482 = vset.pattern.permute.xlu0 0
        %483 = vperm.xlu0 %482, %v479
        %v484 = vpop.permute.xlu0 %483
        %487 = vset.pattern.permute.xlu0 0
        %488 = vperm.xlu0 %487, %v480
        %v489 = vpop.permute.xlu0 %488
        %v493 = vunpack.c.l.b16 %v477
        %v494 = vunpack.c.l.b16 %v478
        %v495 = vpack.c.b16 %v494, %v493
        %v497 = vsel %vm408, %v495, 0
        %499 = vmatpush.bf16.msra.mxu0 0
        %500 = vmatpush.bf16.msra.mxu0 0
        %501 = vmatpush.bf16.msra.mxu0 0
        %502 = vmatpush.bf16.msra.mxu0 0
        %503 = vmatpush.bf16.msra.mxu0 0
        %504 = vmatpush.bf16.msra.mxu0 %v475
        %505 = vmatpush.bf16.msra.mxu0 %v469
        %506 = vmatpush.bf16.msra.mxu0 %v460
        %507 = vmatmul.bf16.gmra.mxu0 %v497
        %v508 = vpop.f32.mrf.mxu0
        %v509 = vadd.f32 %v484, %v508
        %v510 = vpop.f32.mrf.mxu0
        %v511 = vadd.f32 %v489, %v510
        %512 = vdwg.mxu0
        %v513 = vmax.f32 %v509, 0.0
        %v514 = vmax.f32 %v511, 0.0
        %v515 = vld [vmem:[%s6] sm:$0xf]
        %v516 = vld [vmem:[%s6 + $0x4] sm:$0xf]
        %v517 = vld [vmem:[%s7] sm:$0xff]
        %v518 = vld [vmem:[%s7 + $0x8] sm:$0xff]
        %520 = vset.pattern.permute.xlu0 0
        %521 = vperm.xlu0 %520, %v517
        %v522 = vpop.permute.xlu0 %521
        %525 = vset.pattern.permute.xlu0 0
        %526 = vperm.xlu0 %525, %v518
        %v527 = vpop.permute.xlu0 %526
        %v531 = vunpack.c.l.b16 %v515
        %v532 = vunpack.c.l.b16 %v516
        %v533 = vpack.c.b16 %v532, %v531
        %vm534 = vcmask 130048
        %v536 = vsel %vm534, %v533, 0
        %538 = vmatpush.bf16.msra.mxu0 0
        %539 = vmatpush.bf16.msra.mxu0 0
        %540 = vmatpush.bf16.msra.mxu0 0
        %541 = vmatpush.bf16.msra.mxu0 0
        %542 = vmatpush.bf16.msra.mxu0 0
        %543 = vmatpush.bf16.msra.mxu0 0
        %544 = vmatpush.bf16.msra.mxu0 0
        %545 = vmatpush.bf16.msra.mxu0 %v386
        %546 = vmatmul.bf16.gmra.mxu0 %v536
        %v547 = vpop.f32.mrf.mxu0
        %v548 = vadd.f32 %v522, %v547
        %v549 = vpop.f32.mrf.mxu0
        %v550 = vadd.f32 %v527, %v549
        %551 = vdwg.mxu0
        %v552 = vadd.f32 %v513, %v548
        %v553 = vadd.f32 %v514, %v550
        %v554 = vmax.f32 %v552, 0.0
        %v555 = vmax.f32 %v553, 0.0
        %v556 = vpack.c.bf16 %v554, %v554
        %v557 = vpack.c.bf16 %v555, %v555
        %558 = vst [vmem:[%s358] sm:$0xf] %v556
        %559 = vst [vmem:[%s358 + $0x4] sm:$0xf] %v557
        %s560 = sand.u32 %s204, 1
        %s561 = scalar_lea.sflag [#allocation5], %s560
        %s562 = sand.u32 %s204, 1
        %s563 = smul.addr %s562, 8
        %s564 = scalar_lea.vmem [#allocation6], %s563
        // Predicated region
        $region95: #{tpu_custom_call.1} parent=85 // pred_check
          %p565 = pneg %p214
        $region96: #{tpu_custom_call.1} parent=85 // pred_check_branch
          %567 = sbr.rel (%p565) target = $region98
        $region97: #{tpu_custom_call.1} parent=85 // pred_region
          %569 = vsyncadd %s561, 0
          %s570 = smul.addr %s23, 4
          %s571 = scalar_lea.hbm %s8, %s570
          %s572 = sshll.u32 %s564, 4
          %s573 = int_to_ptr.vmem [resolvable:$true] %s572
          %s574 = sshll.u32 %s571, 4
          %s575 = int_to_ptr.hbm [resolvable:$true] %s574
          %580 = dma.vmem_to_hbm [thread:$0]  %s573, 128, %s575, %s561, 64, 128, 4
        $region98: #{tpu_custom_call.1} parent=85 // pred_fallthru
          _
      $region86: #{tpu_custom_call.1} parent=5 // pred_fallthru
        _
      %p581 = scmp.le.s32.totalorder 2, %s18
      // Predicated region
      $region99: #{tpu_custom_call.1} parent=5 // pred_check
        %p582 = pneg %p581
      $region100: #{tpu_custom_call.1} parent=5 // pred_check_branch
        %584 = sbr.rel (%p582) target = $region102
      $region101: #{tpu_custom_call.1} parent=5 // pred_region
        %s585 = ssub.s32 %s18, 2
        // Predicated region
        $region103: #{tpu_custom_call.1} parent=101 // pred_check
          %p586 = pneg %p220
        $region104: #{tpu_custom_call.1} parent=101 // pred_check_branch
          %588 = sbr.rel (%p586) target = $region106
        $region105: #{tpu_custom_call.1} parent=101 // pred_region
          %s589 = sand.u32 %s205, 1
          %s590 = scalar_lea.sflag [#allocation5], %s589
          %s591 = sand.u32 %s205, 1
          %s592 = smul.addr %s591, 8
          %s593 = scalar_lea.vmem [#allocation6], %s592
          %595 = dma.done %s590, 128
        $region106: #{tpu_custom_call.1} parent=101 // pred_fallthru
          _
      $region102: #{tpu_custom_call.1} parent=5 // pred_fallthru
        _
    $region6: #{tpu_custom_call.1} parent=1 // loop_footer
      %s22 = sadd.s32 1, %s18
    $region7: #{tpu_custom_call.1} parent=1 // loop_footer_branch
      %17 = sbr.rel target = $region3
    $region8: #{tpu_custom_call.1} parent=1 // loop_exit
      _
    %596 = vsyncpa [#allocation4], 1
    %s597 = scalar_lea.sflag [#allocation4], 1
    %598 = vsyncpa %s597, 1
    %599 = vsyncpa [#allocation5], 1
    %s600 = scalar_lea.sflag [#allocation5], 1
    %601 = vsyncpa %s600, 1

</llo_original>
